<compile_context>
chip_gen: v5e
topology: v5e:2x2
jax: 0.10.0
libtpu: 0.0.40
codegen_flags: <defaults>
</compile_context>

<pallas_src>
import jax
import jax.numpy as jnp
from jax.experimental import pallas as pl
from jax.experimental.pallas import tpu as pltpu


# ----------------------------------------------------------------------------
# Kernels
# ----------------------------------------------------------------------------
def _linear_kernel(x_ref, wt_ref, b_ref, o_ref):
    # x_ref : (TB, E_in)   input-row tile
    # wt_ref: (E_in, TN)   pre-transposed weight slab (contract dim 0 -> MXU,
    #                      no in-kernel transpose)
    # b_ref : (1, TN)      bias slab (f32)
    # o_ref : (TB, TN)     output tile
    acc = jnp.dot(x_ref[...], wt_ref[...], preferred_element_type=jnp.float32)
    o_ref[...] = (acc + b_ref[...]).astype(o_ref.dtype)


def _linear_pair_kernel(x1_ref, x2_ref, wt_ref, b_ref, o1_ref, o2_ref):
    # Both Siamese branches per grid step: the resident weight/bias are read
    # once and reused for two matmuls (amortizes weight DMA + launch cost).
    wt = wt_ref[...]
    b = b_ref[...]
    a1 = jnp.dot(x1_ref[...], wt, preferred_element_type=jnp.float32)
    a2 = jnp.dot(x2_ref[...], wt, preferred_element_type=jnp.float32)
    o1_ref[...] = (a1 + b).astype(o1_ref.dtype)
    o2_ref[...] = (a2 + b).astype(o2_ref.dtype)


# ----------------------------------------------------------------------------
# Helpers
# ----------------------------------------------------------------------------
def _round_up(x, m):
    return ((x + m - 1) // m) * m


def _round_down(x, m):
    return (x // m) * m


def _vmem_capacity_bytes():
    try:
        return int(pltpu.get_tpu_info().vmem_capacity_bytes)
    except Exception:
        return 64 * 1024 * 1024  # conservative: v7x per-TensorCore VMEM


def _num_tensorcores():
    # Only v7x has 2 TensorCores per chip; fall back to 1 (safe: correctness
    # unaffected, we just skip the 2-way batch split).
    try:
        kind = jax.devices()[0].device_kind.lower()
    except Exception:
        return 1
    return 2 if ("v7" in kind or "7x" in kind) else 1


def _resident_spec(block_shape, index_map):
    # Constant-index (resident) block: double-buffering gives zero pipelining
    # benefit, so request a single buffer to halve its VMEM footprint.
    try:
        return pl.BlockSpec(block_shape, index_map, pipeline_mode=pl.Buffered(1))
    except TypeError:  # very old jax without pipeline_mode: fall back silently
        return pl.BlockSpec(block_shape, index_map)


# ----------------------------------------------------------------------------
# Wrapper
# ----------------------------------------------------------------------------
def _linear_call(xs, weight, bias, *, use_bf16=False, tile_b=None, tile_n=None):
    """Shared builder for 1 (single branch) or 2 (fused Siamese pair) inputs."""
    n_br = len(xs)
    B, E = xs[0].shape
    for x in xs:
        assert x.shape == (B, E)
    assert weight.shape == (E, E) and bias.shape == (E,)
    out_dtype = xs[0].dtype                      # captured before any bf16 cast

    in_dtype = jnp.bfloat16 if use_bf16 else xs[0].dtype
    in_itemsize = jnp.dtype(in_dtype).itemsize
    out_itemsize = jnp.dtype(out_dtype).itemsize
    # bf16 packs 2 rows per sublane -> minimum (16, 128) tile.
    row_mult = 16 if in_itemsize == 2 else 8

    vmem_cap = _vmem_capacity_bytes()
    budget = int(vmem_cap * 0.70)                # headroom for compiler scratch
    num_tc = _num_tensorcores()

    # --- out-feature (N) tiling ---------------------------------------------
    if tile_n is None:
        if E * E * in_itemsize <= budget // 2:
            tile_n = E                           # full weight stays resident
        else:
            # Stream (E, tile_n) weight slabs, double-buffered, MXU-friendly
            # multiples of 256.
            tile_n = _round_down((budget // 2) // (2 * E * in_itemsize), 256)
            tile_n = min(max(tile_n, 256), E)
    resident_w = tile_n >= E
    tile_n = E if resident_w else tile_n
    w_bufs = 1 if resident_w else 2
    w_vmem = w_bufs * E * tile_n * in_itemsize
    b_vmem = w_bufs * 8 * tile_n * 4             # (1, tile_n) f32 pads to 8 sublanes

    # --- batch (M) tiling -----------------------------------------------------
    if tile_b is None:
        per_row = n_br * 2 * (E * in_itemsize + tile_n * out_itemsize)  # x + out, dbl-buf
        max_rows = max(row_mult, (budget - w_vmem - b_vmem) // per_row)
        tile_b = min(512, max_rows, _round_up(B, row_mult))
        if num_tc >= 2 and B > row_mult:
            # keep >=2 grid steps so ("parallel", ...) shards across both TCs
            tile_b = min(tile_b, _round_up(pl.cdiv(B, 2), row_mult))
        tile_b = max(row_mult, _round_down(tile_b, row_mult))
    assert tile_b % row_mult == 0

    B_pad = _round_up(B, tile_b)
    N_pad = _round_up(E, tile_n)

    # --- one-time operand prep (outside the grid loop) ------------------------
    xs_p = []
    for x in xs:
        if use_bf16:
            x = x.astype(jnp.bfloat16)
        if B_pad != B:
            x = jnp.pad(x, ((0, B_pad - B), (0, 0)))
        xs_p.append(x)
    # Single cheap E^2 HBM pass; removes the per-step transposed-RHS layout cost.
    wt = weight.astype(in_dtype).T               # (E_in, E_out)
    b_row = bias.astype(jnp.float32).reshape(1, E)
    if N_pad != E:
        wt = jnp.pad(wt, ((0, 0), (0, N_pad - E)))
        b_row = jnp.pad(b_row, ((0, 0), (0, N_pad - E)))

    # --- specs / grid ----------------------------------------------------------
    grid = (B_pad // tile_b, N_pad // tile_n)
    x_spec = pl.BlockSpec((tile_b, E), lambda i, j: (i, 0))
    if resident_w:
        w_spec = _resident_spec((E, tile_n), lambda i, j: (0, 0))
        bias_spec = _resident_spec((1, tile_n), lambda i, j: (0, 0))
    else:
        w_spec = pl.BlockSpec((E, tile_n), lambda i, j: (0, j))
        bias_spec = pl.BlockSpec((1, tile_n), lambda i, j: (0, j))
    o_spec = pl.BlockSpec((tile_b, tile_n), lambda i, j: (i, j))

    vmem_need = (w_vmem + b_vmem
                 + n_br * 2 * tile_b * E * in_itemsize
                 + n_br * 2 * tile_b * tile_n * out_itemsize)
    vmem_limit = int(min(vmem_cap, max(vmem_need + (2 << 20), 32 << 20)))

    w_reads = 1 if resident_w else grid[0]
    cost = pl.CostEstimate(
        flops=n_br * 2 * B_pad * E * N_pad,
        transcendentals=0,
        bytes_accessed=(n_br * B_pad * E * in_itemsize          # inputs
                        + w_reads * E * N_pad * in_itemsize     # weight
                        + N_pad * 4                             # bias
                        + n_br * B_pad * N_pad * out_itemsize), # outputs
    )

    kernel = _linear_kernel if n_br == 1 else _linear_pair_kernel
    out_shapes = tuple(jax.ShapeDtypeStruct((B_pad, N_pad), out_dtype)
                       for _ in range(n_br))
    out_specs = tuple(o_spec for _ in range(n_br))

    outs = pl.pallas_call(
        kernel,
        out_shape=out_shapes if n_br > 1 else out_shapes[0],
        grid_spec=pltpu.PrefetchScalarGridSpec(
            num_scalar_prefetch=0,
            grid=grid,
            in_specs=[x_spec] * n_br + [w_spec, bias_spec],
            out_specs=out_specs if n_br > 1 else out_specs[0],
        ),
        compiler_params=pltpu.CompilerParams(
            dimension_semantics=("parallel", "parallel"),
            vmem_limit_bytes=vmem_limit,
        ),
        cost_estimate=cost,
    )(*xs_p, wt, b_row)

    if n_br == 1:
        outs = (outs,)
    if B_pad != B or N_pad != E:
        outs = tuple(o[:B, :E] for o in outs)
    return outs


def siamese_forward(x, weight, bias, *, use_bf16=False, tile_b=None, tile_n=None):
    """Pallas implementation of SiameseNetwork.forward (single nn.Linear).

    x: (B, E); weight: (E, E) in PyTorch (out_features, in_features) layout;
    bias: (E,).  use_bf16 casts x/weight to bf16 (f32 accumulation) for
    bandwidth-bound large shapes on v6e/v7x.
    """
    (out,) = _linear_call((x,), weight, bias,
                          use_bf16=use_bf16, tile_b=tile_b, tile_n=tile_n)
    return out


def siamese_forward_pair(x1, x2, weight, bias, **kwargs):
    """Both Siamese branches fused into one pallas_call (no host-side concat:
    two inputs / two outputs share the resident weight per grid step)."""
    return _linear_call((x1, x2), weight, bias, **kwargs)
    # TODO(synk): the pairwise head (e.g. |f(x1)-f(x2)|) is not part of this
    # module's forward, so it is intentionally not fused into the kernel.


# ----------------------------------------------------------------------------
# Demo / self-check
# ----------------------------------------------------------------------------
if __name__ == "__main__":
    embedding_size = 128
    batch = 8

    key = jax.random.PRNGKey(0)
    kx1, kx2, kw, kb = jax.random.split(key, 4)

    # Deterministic init mimicking nn.Linear's uniform(-1/sqrt(E), 1/sqrt(E)).
    bound = 1.0 / jnp.sqrt(embedding_size)
    weight = jax.random.uniform(
        kw, (embedding_size, embedding_size), jnp.float32, -bound, bound)
    bias = jax.random.uniform(kb, (embedding_size,), jnp.float32, -bound, bound)

    x1 = jax.random.normal(kx1, (batch, embedding_size), jnp.float32)
    x2 = jax.random.normal(kx2, (batch, embedding_size), jnp.float32)

    def ref_linear(x):
        # High-precision reference (avoids TPU default bf16-pass matmul noise).
        return jnp.dot(x, weight.T, precision=jax.lax.Precision.HIGHEST) + bias

    # 1) Single branch == SiameseNetwork.forward
    out = jax.block_until_ready(siamese_forward(x1, weight, bias))
    assert out.shape == (batch, embedding_size)
    assert jnp.allclose(out, ref_linear(x1), atol=1e-2, rtol=1e-2)

    # 2) Fused Siamese pair: one pallas_call, no host-side concat
    e1, e2 = jax.block_until_ready(siamese_forward_pair(x1, x2, weight, bias))
    assert jnp.allclose(e1, ref_linear(x1), atol=1e-2, rtol=1e-2)
    assert jnp.allclose(e2, ref_linear(x2), atol=1e-2, rtol=1e-2)

    # 3) Ragged batch exercises the padding path
    xr = jax.random.normal(kx1, (20, embedding_size), jnp.float32)
    outr = jax.block_until_ready(siamese_forward(xr, weight, bias))
    assert outr.shape == (20, embedding_size)
    assert jnp.allclose(outr, ref_linear(xr), atol=1e-2, rtol=1e-2)

    print("KERNEL_OK")
</pallas_src>

<mosaic_0001>
module attributes {stable_mosaic.version = 11 : i64} {
  func.func @_linear_kernel(%arg0: i32, %arg1: i32, %arg2: memref<8x128xf32, #tpu.memory_space<vmem>>, %arg3: memref<128x128xf32, #tpu.memory_space<vmem>>, %arg4: memref<1x128xf32, #tpu.memory_space<vmem>>, %arg5: memref<8x128xf32, #tpu.memory_space<vmem>>) attributes {dimension_semantics = [#tpu.dimension_semantics<parallel>, #tpu.dimension_semantics<parallel>], iteration_bounds = array<i64: 1, 1>, scalar_prefetch = 0 : i64, scratch_operands = 0 : i64, tpu.core_type = #tpu.core_type<tc>, window_params = [{transform_indices = @transform_0, window_bounds = array<i64: 8, 128>}, {pipeline_mode = #tpu.pipeline_mode<synchronous>, transform_indices = @transform_1, window_bounds = array<i64: 128, 128>}, {pipeline_mode = #tpu.pipeline_mode<synchronous>, transform_indices = @transform_2, window_bounds = array<i64: 1, 128>}, {transform_indices = @transform_3, window_bounds = array<i64: 8, 128>}]} {
    %c0 = arith.constant 0 : index
    %c0_0 = arith.constant 0 : index
    %0 = vector.load %arg2[%c0, %c0_0] : memref<8x128xf32, #tpu.memory_space<vmem>>, vector<8x128xf32>
    %c0_1 = arith.constant 0 : index
    %c0_2 = arith.constant 0 : index
    %1 = vector.load %arg3[%c0_1, %c0_2] : memref<128x128xf32, #tpu.memory_space<vmem>>, vector<128x128xf32>
    %cst = arith.constant dense<0.000000e+00> : vector<8x128xf32>
    %2 = tpu.matmul %0, %1, %cst {dimension_numbers = #tpu.dot_dimension_numbers<[1], [0], [0], [1], [0, 0, 1, 1], [], []>} : vector<8x128xf32>, vector<128x128xf32>, vector<8x128xf32> -> vector<8x128xf32>
    %c0_3 = arith.constant 0 : index
    %c0_4 = arith.constant 0 : index
    %3 = vector.load %arg4[%c0_3, %c0_4] : memref<1x128xf32, #tpu.memory_space<vmem>>, vector<1x128xf32>
    %4 = vector.broadcast %3 : vector<1x128xf32> to vector<8x128xf32>
    %5 = arith.addf %2, %4 : vector<8x128xf32>
    %c0_5 = arith.constant 0 : index
    %c0_6 = arith.constant 0 : index
    %6 = vector.load %arg5[%c0_5, %c0_6] : memref<8x128xf32, #tpu.memory_space<vmem>>, vector<8x128xf32>
    tpu.vector_store %arg5[%c0_5, %c0_6], %5 {strides = array<i32>} : memref<8x128xf32, #tpu.memory_space<vmem>>, vector<8x128xf32>,
    return
  }
  func.func @transform_0(%arg0: i32, %arg1: i32) -> (i32, i32) {
    %c0_i32 = arith.constant 0 : i32
    %c0_i32_0 = arith.constant 0 : i32
    return %arg0, %c0_i32 : i32, i32
  }
  func.func @transform_1(%arg0: i32, %arg1: i32) -> (i32, i32) {
    %c0_i32 = arith.constant 0 : i32
    %c0_i32_0 = arith.constant 0 : i32
    %c0_i32_1 = arith.constant 0 : i32
    return %c0_i32, %c0_i32_0 : i32, i32
  }
  func.func @transform_2(%arg0: i32, %arg1: i32) -> (i32, i32) {
    %c0_i32 = arith.constant 0 : i32
    %c0_i32_0 = arith.constant 0 : i32
    %c0_i32_1 = arith.constant 0 : i32
    return %c0_i32, %c0_i32_0 : i32, i32
  }
  func.func @transform_3(%arg0: i32, %arg1: i32) -> (i32, i32) {
    %c0_i32 = arith.constant 0 : i32
    return %arg0, %arg1 : i32, i32
  }
}

</mosaic_0001>

<llo_original>
// kernel: tpu_custom_call.1
$region0: #{tpu_custom_call.1}
  #allocation0 [shape = 'u32[]', space=smem, size = 0x4, offset = 0x4, fixed_abs, tag = 'smem constant byte address 0x4 - core index']
  #allocation1 [shape = 'u32[72,128]{1,0:T(1,128)}', space=vmem, size = 0x9000, scoped, tag = 'internal scratch']
  %s0 = inlined_call_operand.hbm [shape: f32[8,128], index: 0, kind: input, shape index: {}]
  %s1 = inlined_call_operand.hbm [shape: f32[128,128], index: 1, kind: input, shape index: {}]
  %s2 = inlined_call_operand.vmem [shape: f32[1,128], index: 2, kind: input, shape index: {}]
  %s3 = inlined_call_operand.hbm [shape: f32[8,128], index: 3, kind: output, shape index: {}]
  %s4 = sld [smem:[#allocation0]]
  $region30: #{tpu_custom_call.1} parent=0
    _
  %s6 = ssub.s32 1, %s4
  %s7 = scalar_select 0, %s6, %s4
  $region1: #{tpu_custom_call.1} parent=0
    #allocation2 [shape = 'u8[4096]{0}', space=vmem, size = 0x1000, scoped, tag = 'input window, operand 0, single buffered']
    #allocation3 [shape = 's32[1]{0}', space=sflag, size = 0x4, scoped, tag = 'scoped memory for tpu_custom_call.1']
    #allocation4 [shape = 's32[1]{0}', space=sflag, size = 0x4, scoped, tag = 'scoped memory for tpu_custom_call.1']
    #allocation5 [shape = 'u8[65536]{0}', space=vmem, size = 0x10000, scoped, tag = 'input window, operand 1, single buffered']
    #allocation6 [shape = 's32[1]{0}', space=sflag, size = 0x4, scoped, tag = 'scoped memory for tpu_custom_call.1']
    #allocation7 [shape = 'u8[4096]{0}', space=vmem, size = 0x1000, scoped, tag = 'output window, operand 0, single buffered']
    %8 = vsyncpa [#allocation3], 0
    %9 = vsyncpa [#allocation6], 0
    %10 = vsyncpa [#allocation4], 0
    // Predicated region
    $region2: #{tpu_custom_call.1} parent=1 // pred_check
      _
    $region3: #{tpu_custom_call.1} parent=1 // pred_check_branch
      %12 = sbr.rel (0) target = $region5
    $region4: #{tpu_custom_call.1} parent=1 // pred_region
      %14 = vsyncadd [#allocation3], 0
      %s16 = sshll.u32 %s0, 4
      %s17 = int_to_ptr.hbm [resolvable:$true] %s16
      %s18 = sshll.u32 [#allocation2], 4
      %s19 = int_to_ptr.vmem [resolvable:$true] %s18
      %21 = dma.hbm_to_vmem [thread:$0]  %s17, 128, %s19, [#allocation3]
    $region5: #{tpu_custom_call.1} parent=1 // pred_fallthru
      _
    // Predicated region
    $region6: #{tpu_custom_call.1} parent=1 // pred_check
      _
    $region7: #{tpu_custom_call.1} parent=1 // pred_check_branch
      %23 = sbr.rel (0) target = $region9
    $region8: #{tpu_custom_call.1} parent=1 // pred_region
      %25 = vsyncadd [#allocation6], 0
      %s26 = sshll.u32 %s1, 4
      %s27 = int_to_ptr.hbm [resolvable:$true] %s26
      %s28 = sshll.u32 [#allocation5], 4
      %s29 = int_to_ptr.vmem [resolvable:$true] %s28
      %34 = dma.hbm_to_vmem [thread:$0]  %s27, 2048, %s29, [#allocation6], 128, 128, 8
    $region9: #{tpu_custom_call.1} parent=1 // pred_fallthru
      _
    // Predicated region
    $region10: #{tpu_custom_call.1} parent=1 // pred_check
      _
    $region11: #{tpu_custom_call.1} parent=1 // pred_check_branch
      %36 = sbr.rel (0) target = $region13
    $region12: #{tpu_custom_call.1} parent=1 // pred_region
      _
    $region13: #{tpu_custom_call.1} parent=1 // pred_fallthru
      _
    // Predicated region
    $region14: #{tpu_custom_call.1} parent=1 // pred_check
      _
    $region15: #{tpu_custom_call.1} parent=1 // pred_check_branch
      %38 = sbr.rel (0) target = $region17
    $region16: #{tpu_custom_call.1} parent=1 // pred_region
      %40 = dma.done [#allocation3], 128
    $region17: #{tpu_custom_call.1} parent=1 // pred_fallthru
      _
    // Predicated region
    $region18: #{tpu_custom_call.1} parent=1 // pred_check
      _
    $region19: #{tpu_custom_call.1} parent=1 // pred_check_branch
      %42 = sbr.rel (0) target = $region21
    $region20: #{tpu_custom_call.1} parent=1 // pred_region
      %44 = dma.done [#allocation6], 2048
    $region21: #{tpu_custom_call.1} parent=1 // pred_fallthru
      _
    %v45 = vld [vmem:[#allocation2] sm:$0xff]
    %v46 = vld [vmem:[#allocation5] sm:$0xff]
    %v47 = vld [vmem:[#allocation5 + $0x8] sm:$0xff]
    %v48 = vld [vmem:[#allocation5 + $0x10] sm:$0xff]
    %v49 = vld [vmem:[#allocation5 + $0x18] sm:$0xff]
    %v50 = vld [vmem:[#allocation5 + $0x20] sm:$0xff]
    %v51 = vld [vmem:[#allocation5 + $0x28] sm:$0xff]
    %v52 = vld [vmem:[#allocation5 + $0x30] sm:$0xff]
    %v53 = vld [vmem:[#allocation5 + $0x38] sm:$0xff]
    %v54 = vld [vmem:[#allocation5 + $0x40] sm:$0xff]
    %v55 = vld [vmem:[#allocation5 + $0x48] sm:$0xff]
    %v56 = vld [vmem:[#allocation5 + $0x50] sm:$0xff]
    %v57 = vld [vmem:[#allocation5 + $0x58] sm:$0xff]
    %v58 = vld [vmem:[#allocation5 + $0x60] sm:$0xff]
    %v59 = vld [vmem:[#allocation5 + $0x68] sm:$0xff]
    %v60 = vld [vmem:[#allocation5 + $0x70] sm:$0xff]
    %v61 = vld [vmem:[#allocation5 + $0x78] sm:$0xff]
    %v62 = vld [vmem:[%s2] sm:$0x1]
    %v64 = vperm.slane %v62, 0
    %66 = vmatpush.msra.mxu0 %v61
    %67 = vmatpush.msra.mxu0 %v60
    %68 = vmatpush.msra.mxu0 %v59
    %69 = vmatpush.msra.mxu0 %v58
    %70 = vmatpush.msra.mxu0 %v57
    %71 = vmatpush.msra.mxu0 %v56
    %72 = vmatpush.msra.mxu0 %v55
    %73 = vmatpush.msra.mxu0 %v54
    %74 = vmatpush.msra.mxu0 %v53
    %75 = vmatpush.msra.mxu0 %v52
    %76 = vmatpush.msra.mxu0 %v51
    %77 = vmatpush.msra.mxu0 %v50
    %78 = vmatpush.msra.mxu0 %v49
    %79 = vmatpush.msra.mxu0 %v48
    %80 = vmatpush.msra.mxu0 %v47
    %81 = vmatpush.msra.mxu0 %v46
    %82 = vmatmul.f32.gmra.mxu0 %v45
    %v83 = vpop.f32.mrf.mxu0
    %v84 = vadd.f32 %v64, %v83
    %85 = vdwg.mxu0
    %86 = vst [vmem:[#allocation7] sm:$0xff] %v84
    // Predicated region
    $region22: #{tpu_custom_call.1} parent=1 // pred_check
      _
    $region23: #{tpu_custom_call.1} parent=1 // pred_check_branch
      %88 = sbr.rel (0) target = $region25
    $region24: #{tpu_custom_call.1} parent=1 // pred_region
      %90 = vsyncadd [#allocation4], 0
      %s92 = sshll.u32 [#allocation7], 4
      %s93 = int_to_ptr.vmem [resolvable:$true] %s92
      %s94 = sshll.u32 %s3, 4
      %s95 = int_to_ptr.hbm [resolvable:$true] %s94
      %97 = dma.vmem_to_hbm [thread:$0]  %s93, 128, %s95, [#allocation4]
    $region25: #{tpu_custom_call.1} parent=1 // pred_fallthru
      _
    // Predicated region
    $region26: #{tpu_custom_call.1} parent=1 // pred_check
      _
    $region27: #{tpu_custom_call.1} parent=1 // pred_check_branch
      %99 = sbr.rel (0) target = $region29
    $region28: #{tpu_custom_call.1} parent=1 // pred_region
      %101 = dma.done [#allocation4], 128
    $region29: #{tpu_custom_call.1} parent=1 // pred_fallthru
      _
    %102 = vsyncpa [#allocation3], 1
    %103 = vsyncpa [#allocation6], 1
    %104 = vsyncpa [#allocation4], 1

</llo_original>
